<compile_context>
chip_gen: v6e
topology: v6e:2x2x1
jax: 0.10.0
libtpu: 0.0.40
codegen_flags: <defaults>
</compile_context>

<pallas_src>
import functools
import math
import re

import jax
import jax.numpy as jnp
from jax.experimental import pallas as pl
from jax.experimental.pallas import tpu as pltpu


def _round_up(x: int, m: int) -> int:
    return ((x + m - 1) // m) * m


def _elementwise_dtype():
    """bf16 bias-add/tanh on v6e/v7x (bf16 VPU/EUP); f32 on v5e and older."""
    try:
        dev = jax.devices()[0]
        if dev.platform != "tpu":
            return jnp.float32
        m = re.search(r"(\d+)", dev.device_kind)
        if m is not None and int(m.group(1)) >= 6:
            return jnp.bfloat16
    except Exception:
        pass
    return jnp.float32


# ----------------------------- Pallas kernel ------------------------------ #
def _mlp_kernel(*refs):
    """Fused MLP for one batch tile: (Linear+Tanh) x (L-1) -> Linear.

    MXU matmuls use bf16 operands with f32 accumulation.  Bias-add + tanh run
    in the dtype of the bias refs (bf16 on v6e/v7x, f32 on v5e); the final
    layer's bias-add is always f32 and written as f32.
    """
    x_ref = refs[0]
    out_ref = refs[-1]
    wb_refs = refs[1:-1]
    num_layers = len(wb_refs) // 2

    h = x_ref[...].astype(jnp.bfloat16)
    for layer in range(num_layers):
        w_ref = wb_refs[2 * layer]
        b_ref = wb_refs[2 * layer + 1]
        acc = jnp.dot(h, w_ref[...], preferred_element_type=jnp.float32)
        if layer < num_layers - 1:
            z = acc.astype(b_ref.dtype) + b_ref[...]     # bf16 on v6e/v7x, f32 on v5e
            h = jnp.tanh(z).astype(jnp.bfloat16)
        else:
            out_ref[...] = (acc + b_ref[...].astype(jnp.float32)).astype(out_ref.dtype)


# ------------------------------- Wrapper ----------------------------------- #
_TILE_BUCKETS = (16, 32, 64, 128, 256, 512, 1024)


def _choose_tile_n(n: int) -> int:
    """Bucketed batch tile: >=16 rows, bounded padding waste, >=2 grid steps
    for batches >256 (v7x megacore), up to 1024 rows for big batches."""
    n = max(int(n), 1)
    if n <= 256:
        for t in _TILE_BUCKETS:
            if t >= n:
                return t
    cap = max(128, n // 8)          # keeps waste <= tile-1 rows and >=2 (usually >=8) steps
    tile = 128
    for t in _TILE_BUCKETS:
        if t <= cap:
            tile = t
    return tile


@functools.partial(jax.jit, static_argnames=("tile_n",))
def _mlp_forward_impl(x, weights, biases, *, tile_n):
    n, in_dim = x.shape
    n_pad = _round_up(n, tile_n)
    if n_pad != n:                                  # static -> no-op when aligned
        x = jnp.pad(x, ((0, n_pad - n), (0, 0)))

    out_dim = int(weights[-1].shape[1])
    grid = (n_pad // tile_n,)

    in_specs = [pl.BlockSpec((tile_n, in_dim), lambda i: (i, 0))]
    flat = []
    for w, b in zip(weights, biases):
        # Full-array blocks with constant index_map -> VMEM-resident across
        # all batch-tile grid steps (no re-DMA of weights).
        in_specs.append(pl.BlockSpec(w.shape, lambda i: (0, 0)))
        in_specs.append(pl.BlockSpec(b.shape, lambda i: (0, 0)))
        flat.extend([w, b])
    out_spec = pl.BlockSpec((tile_n, out_dim), lambda i: (i, 0))

    flops = 2 * n_pad * sum(int(w.shape[0]) * int(w.shape[1]) for w in weights)
    transcendentals = n_pad * sum(int(w.shape[1]) for w in weights[:-1])
    bytes_accessed = (
        n_pad * in_dim * x.dtype.itemsize
        + n_pad * out_dim * 4
        + sum(int(w.size) * w.dtype.itemsize for w in weights)
        + sum(int(b.size) * b.dtype.itemsize for b in biases))

    out = pl.pallas_call(
        _mlp_kernel,
        out_shape=jax.ShapeDtypeStruct((n_pad, out_dim), jnp.float32),
        grid=grid,
        in_specs=in_specs,
        out_specs=out_spec,
        compiler_params=pltpu.CompilerParams(
            dimension_semantics=("parallel",),
            vmem_limit_bytes=32 * 1024 * 1024),
        cost_estimate=pl.CostEstimate(
            flops=flops,
            transcendentals=transcendentals,
            bytes_accessed=bytes_accessed),
    )(x, *flat)

    if n_pad != n:                                  # row slice only; cheap
        out = out[:n]
    return out


def mlp_forward(x, weights, biases):
    """x: (N, input_dim) float32 -> (N, feature_dim) float32."""
    tile_n = _choose_tile_n(x.shape[0])
    return _mlp_forward_impl(x, tuple(weights), tuple(biases), tile_n=tile_n)


# --------------------------- Parameter creation ---------------------------- #
def init_neural_net_params(key, input_dim, feature_dim,
                           encoder_fc_dim=(512, 256, 256, 128)):
    """Deterministic init mimicking torch.nn.Linear default (U[-1/sqrt(fan_in), ..]).

    Weights stored pre-transposed as (in_dim, out_dim) so y = x @ W + b matches
    torch.nn.Linear(x) = x @ W.T + b.  Master copy kept in float32.
    """
    dims = [input_dim] + list(encoder_fc_dim) + [feature_dim]
    params = []
    for i in range(len(dims) - 1):
        key, kw, kb = jax.random.split(key, 3)
        fan_in, fan_out = dims[i], dims[i + 1]
        bound = 1.0 / math.sqrt(fan_in)
        w = jax.random.uniform(kw, (fan_in, fan_out), jnp.float32, -bound, bound)
        b = jax.random.uniform(kb, (1, fan_out), jnp.float32, -bound, bound)
        params.append((w, b))
    return params


def _prepare_kernel_params(params_f32, ew_dtype):
    """Casts weights to bf16 (MXU operands), hidden biases to the elementwise
    dtype (bf16 on v6e/v7x, f32 on v5e), last bias to f32.  No padding: every
    weight/bias is a full-array block, so arbitrary dims are legal and no zero
    MXU work is added."""
    num = len(params_f32)
    weights, biases = [], []
    for i, (w, b) in enumerate(params_f32):
        weights.append(w.astype(jnp.bfloat16))
        biases.append(b.astype(jnp.float32 if i == num - 1 else ew_dtype))
    return tuple(weights), tuple(biases)


class NeuralNetPallas:
    """JAX/Pallas port of NeuralNet.forward (encoder MLP only)."""

    def __init__(self, state_dim, feature_dim,
                 encoder_fc_dim=(512, 256, 256, 128), key=None):
        if len(encoder_fc_dim) < 1:
            raise ValueError(
                "encoder_fc must have at least one element for the first layer.")
        self.state_dim = state_dim
        self.input_dim = int(math.prod(state_dim))
        self.feature_dim = feature_dim
        self.logstd_range = (-5, 2)
        if key is None:
            key = jax.random.PRNGKey(0)
        self.ew_dtype = _elementwise_dtype()
        self.params_f32 = init_neural_net_params(
            key, self.input_dim, feature_dim, encoder_fc_dim)
        self.kernel_weights, self.kernel_biases = _prepare_kernel_params(
            self.params_f32, self.ew_dtype)

    def forward(self, state, deterministic=True):
        if state.ndim > 2:
            raise ValueError(
                f"The state representation is positional. Should be 2D, "
                f"given {state.ndim}D state dimension.")
        squeeze = state.ndim == 1
        x = state[None, :] if squeeze else state
        feature = mlp_forward(x, self.kernel_weights, self.kernel_biases)
        if squeeze:
            feature = feature[0]
        return feature, {}

    # TODO(synk): `decode` raises NotImplementedError in the PyTorch module; nothing to port.


# --------------------------------- Main ------------------------------------ #
if __name__ == "__main__":
    key = jax.random.PRNGKey(0)
    k_param, k_state = jax.random.split(key)

    state_dim = (32,)       # input_dim = 32
    feature_dim = 16
    batch = 2

    net = NeuralNetPallas(state_dim, feature_dim, key=k_param)

    state = jax.random.normal(k_state, (batch, net.input_dim), jnp.float32)

    feature, info = net.forward(state)
    feature = jax.block_until_ready(feature)

    assert feature.shape == (batch, feature_dim)
    assert feature.dtype == jnp.float32
    assert info == {}

    # Path-matched reference: identical dtypes to the kernel (bf16 MXU operands,
    # f32 accumulation, generation-gated bf16/f32 bias-add + tanh).
    h = state.astype(jnp.bfloat16)
    num = len(net.kernel_weights)
    ref = None
    for i, (w, b) in enumerate(zip(net.kernel_weights, net.kernel_biases)):
        acc = jnp.dot(h, w, preferred_element_type=jnp.float32)
        if i < num - 1:
            h = jnp.tanh(acc.astype(b.dtype) + b).astype(jnp.bfloat16)
        else:
            ref = acc + b.astype(jnp.float32)
    assert jnp.allclose(feature, ref, atol=2e-2, rtol=2e-2), (
        float(jnp.max(jnp.abs(feature - ref))))

    # Loose sanity check against the pure-f32 reference.
    h32 = state
    for i, (w, b) in enumerate(net.params_f32):
        h32 = h32 @ w + b
        if i < len(net.params_f32) - 1:
            h32 = jnp.tanh(h32)
    assert jnp.allclose(feature, h32, atol=1e-1, rtol=1e-1), (
        float(jnp.max(jnp.abs(feature - h32))))

    print("KERNEL_OK")
</pallas_src>

<mosaic_0001>
module attributes {stable_mosaic.version = 11 : i64} {
  func.func @_mlp_kernel(%arg0: i32, %arg1: memref<16x32xf32, #tpu.memory_space<vmem>>, %arg2: memref<32x512xbf16, #tpu.memory_space<vmem>>, %arg3: memref<1x512xf32, #tpu.memory_space<vmem>>, %arg4: memref<512x256xbf16, #tpu.memory_space<vmem>>, %arg5: memref<1x256xf32, #tpu.memory_space<vmem>>, %arg6: memref<256x256xbf16, #tpu.memory_space<vmem>>, %arg7: memref<1x256xf32, #tpu.memory_space<vmem>>, %arg8: memref<256x128xbf16, #tpu.memory_space<vmem>>, %arg9: memref<1x128xf32, #tpu.memory_space<vmem>>, %arg10: memref<128x16xbf16, #tpu.memory_space<vmem>>, %arg11: memref<1x16xf32, #tpu.memory_space<vmem>>, %arg12: memref<16x16xf32, #tpu.memory_space<vmem>>) attributes {dimension_semantics = [#tpu.dimension_semantics<parallel>], iteration_bounds = array<i64: 1>, scalar_prefetch = 0 : i64, scratch_operands = 0 : i64, tpu.core_type = #tpu.core_type<tc>, window_params = [{transform_indices = @transform_0, window_bounds = array<i64: 16, 32>}, {pipeline_mode = #tpu.pipeline_mode<synchronous>, transform_indices = @transform_1, window_bounds = array<i64: 32, 512>}, {pipeline_mode = #tpu.pipeline_mode<synchronous>, transform_indices = @transform_2, window_bounds = array<i64: 1, 512>}, {pipeline_mode = #tpu.pipeline_mode<synchronous>, transform_indices = @transform_3, window_bounds = array<i64: 512, 256>}, {pipeline_mode = #tpu.pipeline_mode<synchronous>, transform_indices = @transform_4, window_bounds = array<i64: 1, 256>}, {pipeline_mode = #tpu.pipeline_mode<synchronous>, transform_indices = @transform_5, window_bounds = array<i64: 256, 256>}, {pipeline_mode = #tpu.pipeline_mode<synchronous>, transform_indices = @transform_6, window_bounds = array<i64: 1, 256>}, {pipeline_mode = #tpu.pipeline_mode<synchronous>, transform_indices = @transform_7, window_bounds = array<i64: 256, 128>}, {pipeline_mode = #tpu.pipeline_mode<synchronous>, transform_indices = @transform_8, window_bounds = array<i64: 1, 128>}, {pipeline_mode = #tpu.pipeline_mode<synchronous>, transform_indices = @transform_9, window_bounds = array<i64: 128, 16>}, {pipeline_mode = #tpu.pipeline_mode<synchronous>, transform_indices = @transform_10, window_bounds = array<i64: 1, 16>}, {transform_indices = @transform_11, window_bounds = array<i64: 16, 16>}]} {
    %c0 = arith.constant 0 : index
    %c0_0 = arith.constant 0 : index
    %0 = vector.load %arg1[%c0, %c0_0] : memref<16x32xf32, #tpu.memory_space<vmem>>, vector<16x32xf32>
    %1 = arith.truncf %0 : vector<16x32xf32> to vector<16x32xbf16>
    %c0_1 = arith.constant 0 : index
    %c0_2 = arith.constant 0 : index
    %2 = vector.load %arg2[%c0_1, %c0_2] : memref<32x512xbf16, #tpu.memory_space<vmem>>, vector<32x512xbf16>
    %cst = arith.constant dense<0.000000e+00> : vector<16x512xf32>
    %3 = tpu.matmul %1, %2, %cst {dimension_numbers = #tpu.dot_dimension_numbers<[1], [0], [0], [1], [0, 0, 1, 1], [], []>} : vector<16x32xbf16>, vector<32x512xbf16>, vector<16x512xf32> -> vector<16x512xf32>
    %c0_3 = arith.constant 0 : index
    %c0_4 = arith.constant 0 : index
    %4 = vector.load %arg3[%c0_3, %c0_4] : memref<1x512xf32, #tpu.memory_space<vmem>>, vector<1x512xf32>
    %5 = vector.broadcast %4 : vector<1x512xf32> to vector<16x512xf32>
    %6 = arith.addf %3, %5 : vector<16x512xf32>
    %7 = math.tanh %6 : vector<16x512xf32>
    %8 = arith.truncf %7 : vector<16x512xf32> to vector<16x512xbf16>
    %c0_5 = arith.constant 0 : index
    %c0_6 = arith.constant 0 : index
    %9 = vector.load %arg4[%c0_5, %c0_6] : memref<512x256xbf16, #tpu.memory_space<vmem>>, vector<512x256xbf16>
    %cst_7 = arith.constant dense<0.000000e+00> : vector<16x256xf32>
    %10 = tpu.matmul %8, %9, %cst_7 {dimension_numbers = #tpu.dot_dimension_numbers<[1], [0], [0], [1], [0, 0, 1, 1], [], []>} : vector<16x512xbf16>, vector<512x256xbf16>, vector<16x256xf32> -> vector<16x256xf32>
    %c0_8 = arith.constant 0 : index
    %c0_9 = arith.constant 0 : index
    %11 = vector.load %arg5[%c0_8, %c0_9] : memref<1x256xf32, #tpu.memory_space<vmem>>, vector<1x256xf32>
    %12 = vector.broadcast %11 : vector<1x256xf32> to vector<16x256xf32>
    %13 = arith.addf %10, %12 : vector<16x256xf32>
    %14 = math.tanh %13 : vector<16x256xf32>
    %15 = arith.truncf %14 : vector<16x256xf32> to vector<16x256xbf16>
    %c0_10 = arith.constant 0 : index
    %c0_11 = arith.constant 0 : index
    %16 = vector.load %arg6[%c0_10, %c0_11] : memref<256x256xbf16, #tpu.memory_space<vmem>>, vector<256x256xbf16>
    %cst_12 = arith.constant dense<0.000000e+00> : vector<16x256xf32>
    %17 = tpu.matmul %15, %16, %cst_12 {dimension_numbers = #tpu.dot_dimension_numbers<[1], [0], [0], [1], [0, 0, 1, 1], [], []>} : vector<16x256xbf16>, vector<256x256xbf16>, vector<16x256xf32> -> vector<16x256xf32>
    %c0_13 = arith.constant 0 : index
    %c0_14 = arith.constant 0 : index
    %18 = vector.load %arg7[%c0_13, %c0_14] : memref<1x256xf32, #tpu.memory_space<vmem>>, vector<1x256xf32>
    %19 = vector.broadcast %18 : vector<1x256xf32> to vector<16x256xf32>
    %20 = arith.addf %17, %19 : vector<16x256xf32>
    %21 = math.tanh %20 : vector<16x256xf32>
    %22 = arith.truncf %21 : vector<16x256xf32> to vector<16x256xbf16>
    %c0_15 = arith.constant 0 : index
    %c0_16 = arith.constant 0 : index
    %23 = vector.load %arg8[%c0_15, %c0_16] : memref<256x128xbf16, #tpu.memory_space<vmem>>, vector<256x128xbf16>
    %cst_17 = arith.constant dense<0.000000e+00> : vector<16x128xf32>
    %24 = tpu.matmul %22, %23, %cst_17 {dimension_numbers = #tpu.dot_dimension_numbers<[1], [0], [0], [1], [0, 0, 1, 1], [], []>} : vector<16x256xbf16>, vector<256x128xbf16>, vector<16x128xf32> -> vector<16x128xf32>
    %c0_18 = arith.constant 0 : index
    %c0_19 = arith.constant 0 : index
    %25 = vector.load %arg9[%c0_18, %c0_19] : memref<1x128xf32, #tpu.memory_space<vmem>>, vector<1x128xf32>
    %26 = vector.broadcast %25 : vector<1x128xf32> to vector<16x128xf32>
    %27 = arith.addf %24, %26 : vector<16x128xf32>
    %28 = math.tanh %27 : vector<16x128xf32>
    %29 = arith.truncf %28 : vector<16x128xf32> to vector<16x128xbf16>
    %c0_20 = arith.constant 0 : index
    %c0_21 = arith.constant 0 : index
    %30 = vector.load %arg10[%c0_20, %c0_21] : memref<128x16xbf16, #tpu.memory_space<vmem>>, vector<128x16xbf16>
    %cst_22 = arith.constant dense<0.000000e+00> : vector<16x16xf32>
    %31 = tpu.matmul %29, %30, %cst_22 {dimension_numbers = #tpu.dot_dimension_numbers<[1], [0], [0], [1], [0, 0, 1, 1], [], []>} : vector<16x128xbf16>, vector<128x16xbf16>, vector<16x16xf32> -> vector<16x16xf32>
    %c0_23 = arith.constant 0 : index
    %c0_24 = arith.constant 0 : index
    %32 = vector.load %arg11[%c0_23, %c0_24] : memref<1x16xf32, #tpu.memory_space<vmem>>, vector<1x16xf32>
    %33 = vector.broadcast %32 : vector<1x16xf32> to vector<16x16xf32>
    %34 = arith.addf %31, %33 : vector<16x16xf32>
    %c0_25 = arith.constant 0 : index
    %c0_26 = arith.constant 0 : index
    %35 = vector.load %arg12[%c0_25, %c0_26] : memref<16x16xf32, #tpu.memory_space<vmem>>, vector<16x16xf32>
    tpu.vector_store %arg12[%c0_25, %c0_26], %34 {strides = array<i32>} : memref<16x16xf32, #tpu.memory_space<vmem>>, vector<16x16xf32>,
    return
  }
  func.func @transform_0(%arg0: i32) -> (i32, i32) {
    %c0_i32 = arith.constant 0 : i32
    %c0_i32_0 = arith.constant 0 : i32
    return %arg0, %c0_i32 : i32, i32
  }
  func.func @transform_1(%arg0: i32) -> (i32, i32) {
    %c0_i32 = arith.constant 0 : i32
    %c0_i32_0 = arith.constant 0 : i32
    %c0_i32_1 = arith.constant 0 : i32
    return %c0_i32, %c0_i32_0 : i32, i32
  }
  func.func @transform_2(%arg0: i32) -> (i32, i32) {
    %c0_i32 = arith.constant 0 : i32
    %c0_i32_0 = arith.constant 0 : i32
    %c0_i32_1 = arith.constant 0 : i32
    return %c0_i32, %c0_i32_0 : i32, i32
  }
  func.func @transform_3(%arg0: i32) -> (i32, i32) {
    %c0_i32 = arith.constant 0 : i32
    %c0_i32_0 = arith.constant 0 : i32
    %c0_i32_1 = arith.constant 0 : i32
    return %c0_i32, %c0_i32_0 : i32, i32
  }
  func.func @transform_4(%arg0: i32) -> (i32, i32) {
    %c0_i32 = arith.constant 0 : i32
    %c0_i32_0 = arith.constant 0 : i32
    %c0_i32_1 = arith.constant 0 : i32
    return %c0_i32, %c0_i32_0 : i32, i32
  }
  func.func @transform_5(%arg0: i32) -> (i32, i32) {
    %c0_i32 = arith.constant 0 : i32
    %c0_i32_0 = arith.constant 0 : i32
    %c0_i32_1 = arith.constant 0 : i32
    return %c0_i32, %c0_i32_0 : i32, i32
  }
  func.func @transform_6(%arg0: i32) -> (i32, i32) {
    %c0_i32 = arith.constant 0 : i32
    %c0_i32_0 = arith.constant 0 : i32
    %c0_i32_1 = arith.constant 0 : i32
    return %c0_i32, %c0_i32_0 : i32, i32
  }
  func.func @transform_7(%arg0: i32) -> (i32, i32) {
    %c0_i32 = arith.constant 0 : i32
    %c0_i32_0 = arith.constant 0 : i32
    %c0_i32_1 = arith.constant 0 : i32
    return %c0_i32, %c0_i32_0 : i32, i32
  }
  func.func @transform_8(%arg0: i32) -> (i32, i32) {
    %c0_i32 = arith.constant 0 : i32
    %c0_i32_0 = arith.constant 0 : i32
    %c0_i32_1 = arith.constant 0 : i32
    return %c0_i32, %c0_i32_0 : i32, i32
  }
  func.func @transform_9(%arg0: i32) -> (i32, i32) {
    %c0_i32 = arith.constant 0 : i32
    %c0_i32_0 = arith.constant 0 : i32
    %c0_i32_1 = arith.constant 0 : i32
    return %c0_i32, %c0_i32_0 : i32, i32
  }
  func.func @transform_10(%arg0: i32) -> (i32, i32) {
    %c0_i32 = arith.constant 0 : i32
    %c0_i32_0 = arith.constant 0 : i32
    %c0_i32_1 = arith.constant 0 : i32
    return %c0_i32, %c0_i32_0 : i32, i32
  }
  func.func @transform_11(%arg0: i32) -> (i32, i32) {
    %c0_i32 = arith.constant 0 : i32
    %c0_i32_0 = arith.constant 0 : i32
    return %arg0, %c0_i32 : i32, i32
  }
}

</mosaic_0001>

<llo_original>
// kernel: _mlp_forward_impl.1
$region0: #{_mlp_forward_impl.1}
  #allocation0 [shape = 'u32[]', space=smem, size = 0x4, offset = 0x4, fixed_abs, tag = 'smem constant byte address 0x4 - core index']
  #allocation1 [shape = 'u32[144,128]{1,0:T(1,128)}', space=vmem, size = 0x12000, scoped, tag = 'internal scratch']
  %s0 = inlined_call_operand.vmem [shape: f32[16,32], index: 0, kind: input, shape index: {}]
  %s1 = inlined_call_operand.vmem [shape: bf16[32,512], index: 1, kind: input, shape index: {}]
  %s2 = inlined_call_operand.vmem [shape: f32[1,512], index: 2, kind: input, shape index: {}]
  %s3 = inlined_call_operand.hbm [shape: bf16[512,256], index: 3, kind: input, shape index: {}]
  %s4 = inlined_call_operand.vmem [shape: f32[1,256], index: 4, kind: input, shape index: {}]
  %s5 = inlined_call_operand.hbm [shape: bf16[256,256], index: 5, kind: input, shape index: {}]
  %s6 = inlined_call_operand.vmem [shape: f32[1,256], index: 6, kind: input, shape index: {}]
  %s7 = inlined_call_operand.hbm [shape: bf16[256,128], index: 7, kind: input, shape index: {}]
  %s8 = inlined_call_operand.vmem [shape: f32[1,128], index: 8, kind: input, shape index: {}]
  %s9 = inlined_call_operand.vmem [shape: bf16[128,16], index: 9, kind: input, shape index: {}]
  %s10 = inlined_call_operand.vmem [shape: f32[1,16], index: 10, kind: input, shape index: {}]
  %s11 = inlined_call_operand.vmem [shape: f32[16,16], index: 11, kind: output, shape index: {}]
  %s12 = sld [smem:[#allocation0]]
  $region66: #{_mlp_forward_impl.1} parent=0
    _
  %s14 = ssub.s32 1, %s12
  %s15 = scalar_select 0, %s14, %s12
  $region1: #{_mlp_forward_impl.1} parent=0
    #allocation2 [shape = 'u8[262144]{0}', space=vmem, size = 0x40000, scoped, tag = 'input window, operand 3, single buffered']
    #allocation3 [shape = 's32[1]{0}', space=sflag, size = 0x4, scoped, tag = 'scoped memory for _mlp_forward_impl.1']
    #allocation4 [shape = 'u8[131072]{0}', space=vmem, size = 0x20000, scoped, tag = 'input window, operand 5, single buffered']
    #allocation5 [shape = 's32[1]{0}', space=sflag, size = 0x4, scoped, tag = 'scoped memory for _mlp_forward_impl.1']
    #allocation6 [shape = 'u8[65536]{0}', space=vmem, size = 0x10000, scoped, tag = 'input window, operand 7, single buffered']
    %16 = vsyncpa [#allocation3], 0
    %17 = vsyncpa [#allocation5], 0
    // Predicated region
    $region2: #{_mlp_forward_impl.1} parent=1 // pred_check
      _
    $region3: #{_mlp_forward_impl.1} parent=1 // pred_check_branch
      %19 = sbr.rel (0) target = $region5
    $region4: #{_mlp_forward_impl.1} parent=1 // pred_region
      _
    $region5: #{_mlp_forward_impl.1} parent=1 // pred_fallthru
      _
    // Predicated region
    $region6: #{_mlp_forward_impl.1} parent=1 // pred_check
      _
    $region7: #{_mlp_forward_impl.1} parent=1 // pred_check_branch
      %21 = sbr.rel (0) target = $region9
    $region8: #{_mlp_forward_impl.1} parent=1 // pred_region
      _
    $region9: #{_mlp_forward_impl.1} parent=1 // pred_fallthru
      _
    // Predicated region
    $region10: #{_mlp_forward_impl.1} parent=1 // pred_check
      _
    $region11: #{_mlp_forward_impl.1} parent=1 // pred_check_branch
      %23 = sbr.rel (0) target = $region13
    $region12: #{_mlp_forward_impl.1} parent=1 // pred_region
      _
    $region13: #{_mlp_forward_impl.1} parent=1 // pred_fallthru
      _
    // Predicated region
    $region14: #{_mlp_forward_impl.1} parent=1 // pred_check
      _
    $region15: #{_mlp_forward_impl.1} parent=1 // pred_check_branch
      %25 = sbr.rel (0) target = $region17
    $region16: #{_mlp_forward_impl.1} parent=1 // pred_region
      %s27 = ssub.s32 8192, 8192
      %28 = vsyncadd [#allocation3], %s27
      %s29 = sshll.u32 [#allocation2], 4
      %s30 = int_to_ptr.vmem [resolvable:$true] %s29
      %35 = dma.hbm_to_vmem [thread:$0]  %s3, 8192, %s30, [#allocation3], 128, 128, 8
    $region17: #{_mlp_forward_impl.1} parent=1 // pred_fallthru
      _
    // Predicated region
    $region18: #{_mlp_forward_impl.1} parent=1 // pred_check
      _
    $region19: #{_mlp_forward_impl.1} parent=1 // pred_check_branch
      %37 = sbr.rel (0) target = $region21
    $region20: #{_mlp_forward_impl.1} parent=1 // pred_region
      _
    $region21: #{_mlp_forward_impl.1} parent=1 // pred_fallthru
      _
    // Predicated region
    $region22: #{_mlp_forward_impl.1} parent=1 // pred_check
      _
    $region23: #{_mlp_forward_impl.1} parent=1 // pred_check_branch
      %39 = sbr.rel (0) target = $region25
    $region24: #{_mlp_forward_impl.1} parent=1 // pred_region
      %s41 = ssub.s32 4096, 4096
      %42 = vsyncadd [#allocation5], %s41
      %s43 = sshll.u32 [#allocation4], 4
      %s44 = int_to_ptr.vmem [resolvable:$true] %s43
      %49 = dma.hbm_to_vmem [thread:$0]  %s5, 4096, %s44, [#allocation5], 128, 128, 8
    $region25: #{_mlp_forward_impl.1} parent=1 // pred_fallthru
      _
    // Predicated region
    $region26: #{_mlp_forward_impl.1} parent=1 // pred_check
      _
    $region27: #{_mlp_forward_impl.1} parent=1 // pred_check_branch
      %51 = sbr.rel (0) target = $region29
    $region28: #{_mlp_forward_impl.1} parent=1 // pred_region
      _
    $region29: #{_mlp_forward_impl.1} parent=1 // pred_fallthru
      _
    // Predicated region
    $region30: #{_mlp_forward_impl.1} parent=1 // pred_check
      _
    $region31: #{_mlp_forward_impl.1} parent=1 // pred_check_branch
      %53 = sbr.rel (0) target = $region33
    $region32: #{_mlp_forward_impl.1} parent=1 // pred_region
      %s55 = ssub.s32 2048, 2048
      %56 = vsyncadd [#allocation5], %s55
      %s57 = sshll.u32 [#allocation6], 4
      %s58 = int_to_ptr.vmem [resolvable:$true] %s57
      %63 = dma.hbm_to_vmem [thread:$0]  %s7, 2048, %s58, [#allocation5], 64, 64, 4
    $region33: #{_mlp_forward_impl.1} parent=1 // pred_fallthru
      _
    // Predicated region
    $region34: #{_mlp_forward_impl.1} parent=1 // pred_check
      _
    $region35: #{_mlp_forward_impl.1} parent=1 // pred_check_branch
      %65 = sbr.rel (0) target = $region37
    $region36: #{_mlp_forward_impl.1} parent=1 // pred_region
      _
    $region37: #{_mlp_forward_impl.1} parent=1 // pred_fallthru
      _
    // Predicated region
    $region38: #{_mlp_forward_impl.1} parent=1 // pred_check
      _
    $region39: #{_mlp_forward_impl.1} parent=1 // pred_check_branch
      %67 = sbr.rel (0) target = $region41
    $region40: #{_mlp_forward_impl.1} parent=1 // pred_region
      _
    $region41: #{_mlp_forward_impl.1} parent=1 // pred_fallthru
      _
    // Predicated region
    $region42: #{_mlp_forward_impl.1} parent=1 // pred_check
      _
    $region43: #{_mlp_forward_impl.1} parent=1 // pred_check_branch
      %69 = sbr.rel (0) target = $region45
    $region44: #{_mlp_forward_impl.1} parent=1 // pred_region
      _
    $region45: #{_mlp_forward_impl.1} parent=1 // pred_fallthru
      _
    // Predicated region
    $region46: #{_mlp_forward_impl.1} parent=1 // pred_check
      _
    $region47: #{_mlp_forward_impl.1} parent=1 // pred_check_branch
      %71 = sbr.rel (0) target = $region49
    $region48: #{_mlp_forward_impl.1} parent=1 // pred_region
      %72 = dma.done [#allocation3], 8192
    $region49: #{_mlp_forward_impl.1} parent=1 // pred_fallthru
      _
    // Predicated region
    $region50: #{_mlp_forward_impl.1} parent=1 // pred_check
      _
    $region51: #{_mlp_forward_impl.1} parent=1 // pred_check_branch
      %74 = sbr.rel (0) target = $region53
    $region52: #{_mlp_forward_impl.1} parent=1 // pred_region
      %75 = dma.done [#allocation5], 4096
    $region53: #{_mlp_forward_impl.1} parent=1 // pred_fallthru
      _
    // Predicated region
    $region54: #{_mlp_forward_impl.1} parent=1 // pred_check
      _
    $region55: #{_mlp_forward_impl.1} parent=1 // pred_check_branch
      %77 = sbr.rel (0) target = $region57
    $region56: #{_mlp_forward_impl.1} parent=1 // pred_region
      %78 = dma.done [#allocation5], 2048
    $region57: #{_mlp_forward_impl.1} parent=1 // pred_fallthru
      _
    %v80 = vld [vmem:[%s0] sm:$0xff]
    %v81 = vld [vmem:[%s0 + $0x8] sm:$0xff]
    %v82 = vpack.c.bf16 %v81, %v80
    %v83 = vld [vmem:[%s1] sm:$0xff]
    %v84 = vld [vmem:[%s1 + $0x8] sm:$0xff]
    %v85 = vld [vmem:[%s1 + $0x10] sm:$0xff]
    %v86 = vld [vmem:[%s1 + $0x18] sm:$0xff]
    %v87 = vld [vmem:[%s1 + $0x20] sm:$0xff]
    %v88 = vld [vmem:[%s1 + $0x28] sm:$0xff]
    %v89 = vld [vmem:[%s1 + $0x30] sm:$0xff]
    %v90 = vld [vmem:[%s1 + $0x38] sm:$0xff]
    %v91 = vld [vmem:[%s2] sm:$0xf]
    %v93 = vlaneseq
    %v94 = vshrl.u32 %v93, 7
    %v95 = vsub.s32 0, %v94
    %v96 = vrot.slane %v91, %v95
    %v97 = vlaneseq
    %v98 = vshrl.u32 %v97, 7
    %v99 = vsub.s32 1, %v98
    %v100 = vrot.slane %v91, %v99
    %v101 = vlaneseq
    %v102 = vshrl.u32 %v101, 7
    %v103 = vsub.s32 2, %v102
    %v104 = vrot.slane %v91, %v103
    %v105 = vlaneseq
    %v106 = vshrl.u32 %v105, 7
    %v107 = vsub.s32 3, %v106
    %v108 = vrot.slane %v91, %v107
    %v121 = vunpack.c.l.b16 %v83
    %v122 = vunpack.c.h.b16 %v83
    %v123 = vunpack.c.l.b16 %v84
    %v124 = vunpack.c.h.b16 %v84
    %v125 = vunpack.c.l.b16 %v85
    %v126 = vunpack.c.h.b16 %v85
    %v127 = vunpack.c.l.b16 %v86
    %v128 = vunpack.c.h.b16 %v86
    %v129 = vunpack.c.l.b16 %v87
    %v130 = vunpack.c.h.b16 %v87
    %v131 = vunpack.c.l.b16 %v88
    %v132 = vunpack.c.h.b16 %v88
    %v133 = vunpack.c.l.b16 %v89
    %v134 = vunpack.c.h.b16 %v89
    %v135 = vunpack.c.l.b16 %v90
    %v136 = vunpack.c.h.b16 %v90
    %v137 = vpack.c.b16 %v125, %v121
    %v138 = vpack.c.b16 %v126, %v122
    %v139 = vpack.c.b16 %v127, %v123
    %v140 = vpack.c.b16 %v128, %v124
    %v141 = vpack.c.b16 %v133, %v129
    %v142 = vpack.c.b16 %v134, %v130
    %v143 = vpack.c.b16 %v135, %v131
    %v144 = vpack.c.b16 %v136, %v132
    %vm153 = vcmask 261120
    %v155 = vsel %vm153, %v82, 0
    %157 = vmatprep.subr.bf16.mxu0 0
    %158 = vmatpush1.bf16.msra.mxu0 0
    %159 = vmatprep.subr.bf16.mxu0 0
    %160 = vmatpush1.bf16.msra.mxu0 0
    %161 = vmatprep.subr.bf16.mxu0 0
    %162 = vmatpush1.bf16.msra.mxu0 0
    %163 = vmatprep.subr.bf16.mxu0 0
    %164 = vmatpush1.bf16.msra.mxu0 0
    %165 = vmatprep.subr.bf16.mxu0 0
    %166 = vmatpush1.bf16.msra.mxu0 0
    %167 = vmatprep.subr.bf16.mxu0 0
    %168 = vmatpush1.bf16.msra.mxu0 0
    %169 = vmatprep.subr.bf16.mxu0 %v142
    %170 = vmatpush1.bf16.msra.mxu0 %v141
    %171 = vmatprep.subr.bf16.mxu0 %v138
    %172 = vmatpush1.bf16.msra.mxu0 %v137
    %173 = vmatprep.subr.bf16.mxu0 0
    %174 = vmatpush2.bf16.msra.mxu0 0
    %175 = vmatprep.subr.bf16.mxu0 0
    %176 = vmatpush2.bf16.msra.mxu0 0
    %177 = vmatprep.subr.bf16.mxu0 0
    %178 = vmatpush2.bf16.msra.mxu0 0
    %179 = vmatprep.subr.bf16.mxu0 0
    %180 = vmatpush2.bf16.msra.mxu0 0
    %181 = vmatprep.subr.bf16.mxu0 0
    %182 = vmatpush2.bf16.msra.mxu0 0
    %183 = vmatprep.subr.bf16.mxu0 0
    %184 = vmatpush2.bf16.msra.mxu0 0
    %185 = vmatprep.subr.bf16.mxu0 0
    %186 = vmatpush2.bf16.msra.mxu0 0
    %187 = vmatprep.subr.bf16.mxu0 0
    %188 = vmatpush2.bf16.msra.mxu0 0
    %189 = vmatprep.mubr.bf16.mxu0 0
    %190 = vmatmul.mubr.bf16.gmra.mxu0 %v155
    %v191 = vpop.f32.mrf.mxu0
    %v192 = vadd.f32 %v96, %v191
    %v193 = vpop.f32.mrf.mxu0
    %v194 = vadd.f32 %v100, %v193
    %v195 = vpop.f32.mrf.mxu0
    %v196 = vadd.f32 %v96, %v195
    %v197 = vpop.f32.mrf.mxu0
    %v198 = vadd.f32 %v100, %v197
    %199 = vdwg.mxu0
    %200 = vmatprep.subr.bf16.mxu0 0
    %201 = vmatpush1.bf16.msra.mxu0 0
    %202 = vmatprep.subr.bf16.mxu0 0
    %203 = vmatpush1.bf16.msra.mxu0 0
    %204 = vmatprep.subr.bf16.mxu0 0
    %205 = vmatpush1.bf16.msra.mxu0 0
    %206 = vmatprep.subr.bf16.mxu0 0
    %207 = vmatpush1.bf16.msra.mxu0 0
    %208 = vmatprep.subr.bf16.mxu0 0
    %209 = vmatpush1.bf16.msra.mxu0 0
    %210 = vmatprep.subr.bf16.mxu0 0
    %211 = vmatpush1.bf16.msra.mxu0 0
    %212 = vmatprep.subr.bf16.mxu0 %v144
    %213 = vmatpush1.bf16.msra.mxu0 %v143
    %214 = vmatprep.subr.bf16.mxu0 %v140
    %215 = vmatpush1.bf16.msra.mxu0 %v139
    %216 = vmatprep.subr.bf16.mxu0 0
    %217 = vmatpush2.bf16.msra.mxu0 0
    %218 = vmatprep.subr.bf16.mxu0 0
    %219 = vmatpush2.bf16.msra.mxu0 0
    %220 = vmatprep.subr.bf16.mxu0 0
    %221 = vmatpush2.bf16.msra.mxu0 0
    %222 = vmatprep.subr.bf16.mxu0 0
    %223 = vmatpush2.bf16.msra.mxu0 0
    %224 = vmatprep.subr.bf16.mxu0 0
    %225 = vmatpush2.bf16.msra.mxu0 0
    %226 = vmatprep.subr.bf16.mxu0 0
    %227 = vmatpush2.bf16.msra.mxu0 0
    %228 = vmatprep.subr.bf16.mxu0 0
    %229 = vmatpush2.bf16.msra.mxu0 0
    %230 = vmatprep.subr.bf16.mxu0 0
    %231 = vmatpush2.bf16.msra.mxu0 0
    %232 = vmatprep.mubr.bf16.mxu0 0
    %233 = vmatmul.mubr.bf16.gmra.mxu0 %v155
    %v234 = vpop.f32.mrf.mxu0
    %v235 = vadd.f32 %v104, %v234
    %v236 = vpop.f32.mrf.mxu0
    %v237 = vadd.f32 %v108, %v236
    %v238 = vpop.f32.mrf.mxu0
    %v239 = vadd.f32 %v104, %v238
    %v240 = vpop.f32.mrf.mxu0
    %v241 = vadd.f32 %v108, %v240
    %242 = vdwg.mxu0
    %v243 = vtanh.pop %v192
    %v244 = vtanh.pop %v194
    %v245 = vtanh.pop %v235
    %v246 = vtanh.pop %v237
    %v247 = vtanh.pop %v196
    %v248 = vtanh.pop %v198
    %v249 = vtanh.pop %v239
    %v250 = vtanh.pop %v241
    %v251 = vpack.c.bf16 %v247, %v243
    %v252 = vpack.c.bf16 %v248, %v244
    %v253 = vpack.c.bf16 %v249, %v245
    %v254 = vpack.c.bf16 %v250, %v246
    %v255 = vld [vmem:[#allocation2] sm:$0xff]
    %v256 = vld [vmem:[#allocation2 + $0x8] sm:$0xff]
    %v257 = vld [vmem:[#allocation2 + $0x10] sm:$0xff]
    %v258 = vld [vmem:[#allocation2 + $0x18] sm:$0xff]
    %v259 = vld [vmem:[#allocation2 + $0x20] sm:$0xff]
    %v260 = vld [vmem:[#allocation2 + $0x28] sm:$0xff]
    %v261 = vld [vmem:[#allocation2 + $0x30] sm:$0xff]
    %v262 = vld [vmem:[#allocation2 + $0x38] sm:$0xff]
    %v263 = vld [vmem:[#allocation2 + $0x40] sm:$0xff]
    %v264 = vld [vmem:[#allocation2 + $0x48] sm:$0xff]
    %v265 = vld [vmem:[#allocation2 + $0x50] sm:$0xff]
    %v266 = vld [vmem:[#allocation2 + $0x58] sm:$0xff]
    %v267 = vld [vmem:[#allocation2 + $0x60] sm:$0xff]
    %v268 = vld [vmem:[#allocation2 + $0x68] sm:$0xff]
    %v269 = vld [vmem:[#allocation2 + $0x70] sm:$0xff]
    %v270 = vld [vmem:[#allocation2 + $0x78] sm:$0xff]
    %v271 = vld [vmem:[#allocation2 + $0x80] sm:$0xff]
    %v272 = vld [vmem:[#allocation2 + $0x88] sm:$0xff]
    %v273 = vld [vmem:[#allocation2 + $0x90] sm:$0xff]
    %v274 = vld [vmem:[#allocation2 + $0x98] sm:$0xff]
    %v275 = vld [vmem:[#allocation2 + $0xa0] sm:$0xff]
    %v276 = vld [vmem:[#allocation2 + $0xa8] sm:$0xff]
    %v277 = vld [vmem:[#allocation2 + $0xb0] sm:$0xff]
    %v278 = vld [vmem:[#allocation2 + $0xb8] sm:$0xff]
    %v279 = vld [vmem:[#allocation2 + $0xc0] sm:$0xff]
    %v280 = vld [vmem:[#allocation2 + $0xc8] sm:$0xff]
    %v281 = vld [vmem:[#allocation2 + $0xd0] sm:$0xff]
    %v282 = vld [vmem:[#allocation2 + $0xd8] sm:$0xff]
    %v283 = vld [vmem:[#allocation2 + $0xe0] sm:$0xff]
    %v284 = vld [vmem:[#allocation2 + $0xe8] sm:$0xff]
    %v285 = vld [vmem:[#allocation2 + $0xf0] sm:$0xff]
    %v286 = vld [vmem:[#allocation2 + $0xf8] sm:$0xff]
    %v287 = vld [vmem:[#allocation2 + $0x100] sm:$0xff]
    %v288 = vld [vmem:[#allocation2 + $0x108] sm:$0xff]
    %v289 = vld [vmem:[#allocation2 + $0x110] sm:$0xff]
    %v290 = vld [vmem:[#allocation2 + $0x118] sm:$0xff]
    %v291 = vld [vmem:[#allocation2 + $0x120] sm:$0xff]
    %v292 = vld [vmem:[#allocation2 + $0x128] sm:$0xff]
    %v293 = vld [vmem:[#allocation2 + $0x130] sm:$0xff]
    %v294 = vld [vmem:[#allocation2 + $0x138] sm:$0xff]
    %v295 = vld [vmem:[#allocation2 + $0x140] sm:$0xff]
    %v296 = vld [vmem:[#allocation2 + $0x148] sm:$0xff]
    %v297 = vld [vmem:[#allocation2 + $0x150] sm:$0xff]
    %v298 = vld [vmem:[#allocation2 + $0x158] sm:$0xff]
    %v299 = vld [vmem:[#allocation2 + $0x160] sm:$0xff]
    %v300 = vld [vmem:[#allocation2 + $0x168] sm:$0xff]
    %v301 = vld [vmem:[#allocation2 + $0x170] sm:$0xff]
    %v302 = vld [vmem:[#allocation2 + $0x178] sm:$0xff]
    %v303 = vld [vmem:[#allocation2 + $0x180] sm:$0xff]
    %v304 = vld [vmem:[#allocation2 + $0x188] sm:$0xff]
    %v305 = vld [vmem:[#allocation2 + $0x190] sm:$0xff]
    %v306 = vld [vmem:[#allocation2 + $0x198] sm:$0xff]
    %v307 = vld [vmem:[#allocation2 + $0x1a0] sm:$0xff]
    %v308 = vld [vmem:[#allocation2 + $0x1a8] sm:$0xff]
    %v309 = vld [vmem:[#allocation2 + $0x1b0] sm:$0xff]
    %v310 = vld [vmem:[#allocation2 + $0x1b8] sm:$0xff]
    %v311 = vld [vmem:[#allocation2 + $0x1c0] sm:$0xff]
    %v312 = vld [vmem:[#allocation2 + $0x1c8] sm:$0xff]
    %v313 = vld [vmem:[#allocation2 + $0x1d0] sm:$0xff]
    %v314 = vld [vmem:[#allocation2 + $0x1d8] sm:$0xff]
    %v315 = vld [vmem:[#allocation2 + $0x1e0] sm:$0xff]
    %v316 = vld [vmem:[#allocation2 + $0x1e8] sm:$0xff]
    %v317 = vld [vmem:[#allocation2 + $0x1f0] sm:$0xff]
    %v318 = vld [vmem:[#allocation2 + $0x1f8] sm:$0xff]
    %v319 = vld [vmem:[%s4] sm:$0x3]
    %v321 = vlaneseq
    %v322 = vshrl.u32 %v321, 7
    %v323 = vsub.s32 0, %v322
    %v324 = vrot.slane %v319, %v323
    %v325 = vlaneseq
    %v326 = vshrl.u32 %v325, 7
    %v327 = vsub.s32 1, %v326
    %v328 = vrot.slane %v319, %v327
    %v395 = vunpack.c.l.b16 %v255
    %v396 = vunpack.c.h.b16 %v255
    %v397 = vunpack.c.l.b16 %v256
    %v398 = vunpack.c.h.b16 %v256
    %v399 = vunpack.c.l.b16 %v257
    %v400 = vunpack.c.h.b16 %v257
    %v401 = vunpack.c.l.b16 %v258
    %v402 = vunpack.c.h.b16 %v258
    %v403 = vunpack.c.l.b16 %v259
    %v404 = vunpack.c.h.b16 %v259
    %v405 = vunpack.c.l.b16 %v260
    %v406 = vunpack.c.h.b16 %v260
    %v407 = vunpack.c.l.b16 %v261
    %v408 = vunpack.c.h.b16 %v261
    %v409 = vunpack.c.l.b16 %v262
    %v410 = vunpack.c.h.b16 %v262
    %v411 = vunpack.c.l.b16 %v263
    %v412 = vunpack.c.h.b16 %v263
    %v413 = vunpack.c.l.b16 %v264
    %v414 = vunpack.c.h.b16 %v264
    %v415 = vunpack.c.l.b16 %v265
    %v416 = vunpack.c.h.b16 %v265
    %v417 = vunpack.c.l.b16 %v266
    %v418 = vunpack.c.h.b16 %v266
    %v419 = vunpack.c.l.b16 %v267
    %v420 = vunpack.c.h.b16 %v267
    %v421 = vunpack.c.l.b16 %v268
    %v422 = vunpack.c.h.b16 %v268
    %v423 = vunpack.c.l.b16 %v269
    %v424 = vunpack.c.h.b16 %v269
    %v425 = vunpack.c.l.b16 %v270
    %v426 = vunpack.c.h.b16 %v270
    %v427 = vunpack.c.l.b16 %v271
    %v428 = vunpack.c.h.b16 %v271
    %v429 = vunpack.c.l.b16 %v272
    %v430 = vunpack.c.h.b16 %v272
    %v431 = vunpack.c.l.b16 %v273
    %v432 = vunpack.c.h.b16 %v273
    %v433 = vunpack.c.l.b16 %v274
    %v434 = vunpack.c.h.b16 %v274
    %v435 = vunpack.c.l.b16 %v275
    %v436 = vunpack.c.h.b16 %v275
    %v437 = vunpack.c.l.b16 %v276
    %v438 = vunpack.c.h.b16 %v276
    %v439 = vunpack.c.l.b16 %v277
    %v440 = vunpack.c.h.b16 %v277
    %v441 = vunpack.c.l.b16 %v278
    %v442 = vunpack.c.h.b16 %v278
    %v443 = vunpack.c.l.b16 %v279
    %v444 = vunpack.c.h.b16 %v279
    %v445 = vunpack.c.l.b16 %v280
    %v446 = vunpack.c.h.b16 %v280
    %v447 = vunpack.c.l.b16 %v281
    %v448 = vunpack.c.h.b16 %v281
    %v449 = vunpack.c.l.b16 %v282
    %v450 = vunpack.c.h.b16 %v282
    %v451 = vunpack.c.l.b16 %v283
    %v452 = vunpack.c.h.b16 %v283
    %v453 = vunpack.c.l.b16 %v284
    %v454 = vunpack.c.h.b16 %v284
    %v455 = vunpack.c.l.b16 %v285
    %v456 = vunpack.c.h.b16 %v285
    %v457 = vunpack.c.l.b16 %v286
    %v458 = vunpack.c.h.b16 %v286
    %v459 = vunpack.c.l.b16 %v287
    %v460 = vunpack.c.h.b16 %v287
    %v461 = vunpack.c.l.b16 %v288
    %v462 = vunpack.c.h.b16 %v288
    %v463 = vunpack.c.l.b16 %v289
    %v464 = vunpack.c.h.b16 %v289
    %v465 = vunpack.c.l.b16 %v290
    %v466 = vunpack.c.h.b16 %v290
    %v467 = vunpack.c.l.b16 %v291
    %v468 = vunpack.c.h.b16 %v291
    %v469 = vunpack.c.l.b16 %v292
    %v470 = vunpack.c.h.b16 %v292
    %v471 = vunpack.c.l.b16 %v293
    %v472 = vunpack.c.h.b16 %v293
    %v473 = vunpack.c.l.b16 %v294
    %v474 = vunpack.c.h.b16 %v294
    %v475 = vunpack.c.l.b16 %v295
    %v476 = vunpack.c.h.b16 %v295
    %v477 = vunpack.c.l.b16 %v296
    %v478 = vunpack.c.h.b16 %v296
    %v479 = vunpack.c.l.b16 %v297
    %v480 = vunpack.c.h.b16 %v297
    %v481 = vunpack.c.l.b16 %v298
    %v482 = vunpack.c.h.b16 %v298
    %v483 = vunpack.c.l.b16 %v299
    %v484 = vunpack.c.h.b16 %v299
    %v485 = vunpack.c.l.b16 %v300
    %v486 = vunpack.c.h.b16 %v300
    %v487 = vunpack.c.l.b16 %v301
    %v488 = vunpack.c.h.b16 %v301
    %v489 = vunpack.c.l.b16 %v302
    %v490 = vunpack.c.h.b16 %v302
    %v491 = vunpack.c.l.b16 %v303
    %v492 = vunpack.c.h.b16 %v303
    %v493 = vunpack.c.l.b16 %v304
    %v494 = vunpack.c.h.b16 %v304
    %v495 = vunpack.c.l.b16 %v305
    %v496 = vunpack.c.h.b16 %v305
    %v497 = vunpack.c.l.b16 %v306
    %v498 = vunpack.c.h.b16 %v306
    %v499 = vunpack.c.l.b16 %v307
    %v500 = vunpack.c.h.b16 %v307
    %v501 = vunpack.c.l.b16 %v308
    %v502 = vunpack.c.h.b16 %v308
    %v503 = vunpack.c.l.b16 %v309
    %v504 = vunpack.c.h.b16 %v309
    %v505 = vunpack.c.l.b16 %v310
    %v506 = vunpack.c.h.b16 %v310
    %v507 = vunpack.c.l.b16 %v311
    %v508 = vunpack.c.h.b16 %v311
    %v509 = vunpack.c.l.b16 %v312
    %v510 = vunpack.c.h.b16 %v312
    %v511 = vunpack.c.l.b16 %v313
    %v512 = vunpack.c.h.b16 %v313
    %v513 = vunpack.c.l.b16 %v314
    %v514 = vunpack.c.h.b16 %v314
    %v515 = vunpack.c.l.b16 %v315
    %v516 = vunpack.c.h.b16 %v315
    %v517 = vunpack.c.l.b16 %v316
    %v518 = vunpack.c.h.b16 %v316
    %v519 = vunpack.c.l.b16 %v317
    %v520 = vunpack.c.h.b16 %v317
    %v521 = vunpack.c.l.b16 %v318
    %v522 = vunpack.c.h.b16 %v318
    %v523 = vpack.c.b16 %v397, %v395
    %v524 = vpack.c.b16 %v398, %v396
    %v525 = vpack.c.b16 %v401, %v399
    %v526 = vpack.c.b16 %v402, %v400
    %v527 = vpack.c.b16 %v405, %v403
    %v528 = vpack.c.b16 %v406, %v404
    %v529 = vpack.c.b16 %v409, %v407
    %v530 = vpack.c.b16 %v410, %v408
    %v531 = vpack.c.b16 %v413, %v411
    %v532 = vpack.c.b16 %v414, %v412
    %v533 = vpack.c.b16 %v417, %v415
    %v534 = vpack.c.b16 %v418, %v416
    %v535 = vpack.c.b16 %v421, %v419
    %v536 = vpack.c.b16 %v422, %v420
    %v537 = vpack.c.b16 %v425, %v423
    %v538 = vpack.c.b16 %v426, %v424
    %v539 = vpack.c.b16 %v429, %v427
    %v540 = vpack.c.b16 %v430, %v428
    %v541 = vpack.c.b16 %v433, %v431
    %v542 = vpack.c.b16 %v434, %v432
    %v543 = vpack.c.b16 %v437, %v435
    %v544 = vpack.c.b16 %v438, %v436
    %v545 = vpack.c.b16 %v441, %v439
    %v546 = vpack.c.b16 %v442, %v440
    %v547 = vpack.c.b16 %v445, %v443
    %v548 = vpack.c.b16 %v446, %v444
    %v549 = vpack.c.b16 %v449, %v447
    %v550 = vpack.c.b16 %v450, %v448
    %v551 = vpack.c.b16 %v453, %v451
    %v552 = vpack.c.b16 %v454, %v452
    %v553 = vpack.c.b16 %v457, %v455
    %v554 = vpack.c.b16 %v458, %v456
    %v555 = vpack.c.b16 %v461, %v459
    %v556 = vpack.c.b16 %v462, %v460
    %v557 = vpack.c.b16 %v465, %v463
    %v558 = vpack.c.b16 %v466, %v464
    %v559 = vpack.c.b16 %v469, %v467
    %v560 = vpack.c.b16 %v470, %v468
    %v561 = vpack.c.b16 %v473, %v471
    %v562 = vpack.c.b16 %v474, %v472
    %v563 = vpack.c.b16 %v477, %v475
    %v564 = vpack.c.b16 %v478, %v476
    %v565 = vpack.c.b16 %v481, %v479
    %v566 = vpack.c.b16 %v482, %v480
    %v567 = vpack.c.b16 %v485, %v483
    %v568 = vpack.c.b16 %v486, %v484
    %v569 = vpack.c.b16 %v489, %v487
    %v570 = vpack.c.b16 %v490, %v488
    %v571 = vpack.c.b16 %v493, %v491
    %v572 = vpack.c.b16 %v494, %v492
    %v573 = vpack.c.b16 %v497, %v495
    %v574 = vpack.c.b16 %v498, %v496
    %v575 = vpack.c.b16 %v501, %v499
    %v576 = vpack.c.b16 %v502, %v500
    %v577 = vpack.c.b16 %v505, %v503
    %v578 = vpack.c.b16 %v506, %v504
    %v579 = vpack.c.b16 %v509, %v507
    %v580 = vpack.c.b16 %v510, %v508
    %v581 = vpack.c.b16 %v513, %v511
    %v582 = vpack.c.b16 %v514, %v512
    %v583 = vpack.c.b16 %v517, %v515
    %v584 = vpack.c.b16 %v518, %v516
    %v585 = vpack.c.b16 %v521, %v519
    %v586 = vpack.c.b16 %v522, %v520
    %651 = vmatprep.subr.bf16.mxu0 %v538
    %652 = vmatpush1.bf16.msra.mxu0 %v537
    %653 = vmatprep.subr.bf16.mxu0 %v536
    %654 = vmatpush1.bf16.msra.mxu0 %v535
    %655 = vmatprep.subr.bf16.mxu0 %v534
    %656 = vmatpush1.bf16.msra.mxu0 %v533
    %657 = vmatprep.subr.bf16.mxu0 %v532
    %658 = vmatpush1.bf16.msra.mxu0 %v531
    %659 = vmatprep.subr.bf16.mxu0 %v530
    %660 = vmatpush1.bf16.msra.mxu0 %v529
    %661 = vmatprep.subr.bf16.mxu0 %v528
    %662 = vmatpush1.bf16.msra.mxu0 %v527
    %663 = vmatprep.subr.bf16.mxu0 %v526
    %664 = vmatpush1.bf16.msra.mxu0 %v525
    %665 = vmatprep.subr.bf16.mxu0 %v524
    %666 = vmatpush1.bf16.msra.mxu0 %v523
    %667 = vmatprep.subr.bf16.mxu0 %v554
    %668 = vmatpush2.bf16.msra.mxu0 %v553
    %669 = vmatprep.subr.bf16.mxu0 %v552
    %670 = vmatpush2.bf16.msra.mxu0 %v551
    %671 = vmatprep.subr.bf16.mxu0 %v550
    %672 = vmatpush2.bf16.msra.mxu0 %v549
    %673 = vmatprep.subr.bf16.mxu0 %v548
    %674 = vmatpush2.bf16.msra.mxu0 %v547
    %675 = vmatprep.subr.bf16.mxu0 %v546
    %676 = vmatpush2.bf16.msra.mxu0 %v545
    %677 = vmatprep.subr.bf16.mxu0 %v544
    %678 = vmatpush2.bf16.msra.mxu0 %v543
    %679 = vmatprep.subr.bf16.mxu0 %v542
    %680 = vmatpush2.bf16.msra.mxu0 %v541
    %681 = vmatprep.subr.bf16.mxu0 %v540
    %682 = vmatpush2.bf16.msra.mxu0 %v539
    %683 = vmatprep.mubr.bf16.mxu0 %v252
    %684 = vmatmul.mubr.bf16.gmra.mxu0 %v251
    %v685 = vpop.f32.mrf.mxu0
    %v686 = vadd.f32 %v324, %v685
    %v687 = vpop.f32.mrf.mxu0
    %v688 = vadd.f32 %v328, %v687
    %v689 = vpop.f32.mrf.mxu0
    %v690 = vadd.f32 %v324, %v689
    %v691 = vpop.f32.mrf.mxu0
    %v692 = vadd.f32 %v328, %v691
    %693 = vdwg.mxu0
    %694 = vmatprep.subr.bf16.mxu0 %v570
    %695 = vmatpush1.bf16.msra.mxu0 %v569
    %696 = vmatprep.subr.bf16.mxu0 %v568
    %697 = vmatpush1.bf16.msra.mxu0 %v567
    %698 = vmatprep.subr.bf16.mxu0 %v566
    %699 = vmatpush1.bf16.msra.mxu0 %v565
    %700 = vmatprep.subr.bf16.mxu0 %v564
    %701 = vmatpush1.bf16.msra.mxu0 %v563
    %702 = vmatprep.subr.bf16.mxu0 %v562
    %703 = vmatpush1.bf16.msra.mxu0 %v561
    %704 = vmatprep.subr.bf16.mxu0 %v560
    %705 = vmatpush1.bf16.msra.mxu0 %v559
    %706 = vmatprep.subr.bf16.mxu0 %v558
    %707 = vmatpush1.bf16.msra.mxu0 %v557
    %708 = vmatprep.subr.bf16.mxu0 %v556
    %709 = vmatpush1.bf16.msra.mxu0 %v555
    %710 = vmatprep.subr.bf16.mxu0 %v586
    %711 = vmatpush2.bf16.msra.mxu0 %v585
    %712 = vmatprep.subr.bf16.mxu0 %v584
    %713 = vmatpush2.bf16.msra.mxu0 %v583
    %714 = vmatprep.subr.bf16.mxu0 %v582
    %715 = vmatpush2.bf16.msra.mxu0 %v581
    %716 = vmatprep.subr.bf16.mxu0 %v580
    %717 = vmatpush2.bf16.msra.mxu0 %v579
    %718 = vmatprep.subr.bf16.mxu0 %v578
    %719 = vmatpush2.bf16.msra.mxu0 %v577
    %720 = vmatprep.subr.bf16.mxu0 %v576
    %721 = vmatpush2.bf16.msra.mxu0 %v575
    %722 = vmatprep.subr.bf16.mxu0 %v574
    %723 = vmatpush2.bf16.msra.mxu0 %v573
    %724 = vmatprep.subr.bf16.mxu0 %v572
    %725 = vmatpush2.bf16.msra.mxu0 %v571
    %726 = vmatprep.mubr.bf16.mxu0 %v254
    %727 = vmatmul.mubr.bf16.gmra.mxu0 %v253
    %v728 = vpop.f32.mrf.mxu0
    %v729 = vadd.f32 %v686, %v728
    %v730 = vpop.f32.mrf.mxu0
    %v731 = vadd.f32 %v688, %v730
    %v732 = vpop.f32.mrf.mxu0
    %v733 = vadd.f32 %v690, %v732
    %v734 = vpop.f32.mrf.mxu0
    %v735 = vadd.f32 %v692, %v734
    %736 = vdwg.mxu0
    %v737 = vtanh.pop %v729
    %v738 = vtanh.pop %v731
    %v739 = vtanh.pop %v733
    %v740 = vtanh.pop %v735
    %v741 = vpack.c.bf16 %v739, %v737
    %v742 = vpack.c.bf16 %v740, %v738
    %v743 = vld [vmem:[#allocation4] sm:$0xff]
    %v744 = vld [vmem:[#allocation4 + $0x8] sm:$0xff]
    %v745 = vld [vmem:[#allocation4 + $0x10] sm:$0xff]
    %v746 = vld [vmem:[#allocation4 + $0x18] sm:$0xff]
    %v747 = vld [vmem:[#allocation4 + $0x20] sm:$0xff]
    %v748 = vld [vmem:[#allocation4 + $0x28] sm:$0xff]
    %v749 = vld [vmem:[#allocation4 + $0x30] sm:$0xff]
    %v750 = vld [vmem:[#allocation4 + $0x38] sm:$0xff]
    %v751 = vld [vmem:[#allocation4 + $0x40] sm:$0xff]
    %v752 = vld [vmem:[#allocation4 + $0x48] sm:$0xff]
    %v753 = vld [vmem:[#allocation4 + $0x50] sm:$0xff]
    %v754 = vld [vmem:[#allocation4 + $0x58] sm:$0xff]
    %v755 = vld [vmem:[#allocation4 + $0x60] sm:$0xff]
    %v756 = vld [vmem:[#allocation4 + $0x68] sm:$0xff]
    %v757 = vld [vmem:[#allocation4 + $0x70] sm:$0xff]
    %v758 = vld [vmem:[#allocation4 + $0x78] sm:$0xff]
    %v759 = vld [vmem:[#allocation4 + $0x80] sm:$0xff]
    %v760 = vld [vmem:[#allocation4 + $0x88] sm:$0xff]
    %v761 = vld [vmem:[#allocation4 + $0x90] sm:$0xff]
    %v762 = vld [vmem:[#allocation4 + $0x98] sm:$0xff]
    %v763 = vld [vmem:[#allocation4 + $0xa0] sm:$0xff]
    %v764 = vld [vmem:[#allocation4 + $0xa8] sm:$0xff]
    %v765 = vld [vmem:[#allocation4 + $0xb0] sm:$0xff]
    %v766 = vld [vmem:[#allocation4 + $0xb8] sm:$0xff]
    %v767 = vld [vmem:[#allocation4 + $0xc0] sm:$0xff]
    %v768 = vld [vmem:[#allocation4 + $0xc8] sm:$0xff]
    %v769 = vld [vmem:[#allocation4 + $0xd0] sm:$0xff]
    %v770 = vld [vmem:[#allocation4 + $0xd8] sm:$0xff]
    %v771 = vld [vmem:[#allocation4 + $0xe0] sm:$0xff]
    %v772 = vld [vmem:[#allocation4 + $0xe8] sm:$0xff]
    %v773 = vld [vmem:[#allocation4 + $0xf0] sm:$0xff]
    %v774 = vld [vmem:[#allocation4 + $0xf8] sm:$0xff]
    %v775 = vld [vmem:[%s6] sm:$0x3]
    %v777 = vlaneseq
    %v778 = vshrl.u32 %v777, 7
    %v779 = vsub.s32 0, %v778
    %v780 = vrot.slane %v775, %v779
    %v781 = vlaneseq
    %v782 = vshrl.u32 %v781, 7
    %v783 = vsub.s32 1, %v782
    %v784 = vrot.slane %v775, %v783
    %v819 = vunpack.c.l.b16 %v743
    %v820 = vunpack.c.h.b16 %v743
    %v821 = vunpack.c.l.b16 %v744
    %v822 = vunpack.c.h.b16 %v744
    %v823 = vunpack.c.l.b16 %v745
    %v824 = vunpack.c.h.b16 %v745
    %v825 = vunpack.c.l.b16 %v746
    %v826 = vunpack.c.h.b16 %v746
    %v827 = vunpack.c.l.b16 %v747
    %v828 = vunpack.c.h.b16 %v747
    %v829 = vunpack.c.l.b16 %v748
    %v830 = vunpack.c.h.b16 %v748
    %v831 = vunpack.c.l.b16 %v749
    %v832 = vunpack.c.h.b16 %v749
    %v833 = vunpack.c.l.b16 %v750
    %v834 = vunpack.c.h.b16 %v750
    %v835 = vunpack.c.l.b16 %v751
    %v836 = vunpack.c.h.b16 %v751
    %v837 = vunpack.c.l.b16 %v752
    %v838 = vunpack.c.h.b16 %v752
    %v839 = vunpack.c.l.b16 %v753
    %v840 = vunpack.c.h.b16 %v753
    %v841 = vunpack.c.l.b16 %v754
    %v842 = vunpack.c.h.b16 %v754
    %v843 = vunpack.c.l.b16 %v755
    %v844 = vunpack.c.h.b16 %v755
    %v845 = vunpack.c.l.b16 %v756
    %v846 = vunpack.c.h.b16 %v756
    %v847 = vunpack.c.l.b16 %v757
    %v848 = vunpack.c.h.b16 %v757
    %v849 = vunpack.c.l.b16 %v758
    %v850 = vunpack.c.h.b16 %v758
    %v851 = vunpack.c.l.b16 %v759
    %v852 = vunpack.c.h.b16 %v759
    %v853 = vunpack.c.l.b16 %v760
    %v854 = vunpack.c.h.b16 %v760
    %v855 = vunpack.c.l.b16 %v761
    %v856 = vunpack.c.h.b16 %v761
    %v857 = vunpack.c.l.b16 %v762
    %v858 = vunpack.c.h.b16 %v762
    %v859 = vunpack.c.l.b16 %v763
    %v860 = vunpack.c.h.b16 %v763
    %v861 = vunpack.c.l.b16 %v764
    %v862 = vunpack.c.h.b16 %v764
    %v863 = vunpack.c.l.b16 %v765
    %v864 = vunpack.c.h.b16 %v765
    %v865 = vunpack.c.l.b16 %v766
    %v866 = vunpack.c.h.b16 %v766
    %v867 = vunpack.c.l.b16 %v767
    %v868 = vunpack.c.h.b16 %v767
    %v869 = vunpack.c.l.b16 %v768
    %v870 = vunpack.c.h.b16 %v768
    %v871 = vunpack.c.l.b16 %v769
    %v872 = vunpack.c.h.b16 %v769
    %v873 = vunpack.c.l.b16 %v770
    %v874 = vunpack.c.h.b16 %v770
    %v875 = vunpack.c.l.b16 %v771
    %v876 = vunpack.c.h.b16 %v771
    %v877 = vunpack.c.l.b16 %v772
    %v878 = vunpack.c.h.b16 %v772
    %v879 = vunpack.c.l.b16 %v773
    %v880 = vunpack.c.h.b16 %v773
    %v881 = vunpack.c.l.b16 %v774
    %v882 = vunpack.c.h.b16 %v774
    %v883 = vpack.c.b16 %v821, %v819
    %v884 = vpack.c.b16 %v822, %v820
    %v885 = vpack.c.b16 %v825, %v823
    %v886 = vpack.c.b16 %v826, %v824
    %v887 = vpack.c.b16 %v829, %v827
    %v888 = vpack.c.b16 %v830, %v828
    %v889 = vpack.c.b16 %v833, %v831
    %v890 = vpack.c.b16 %v834, %v832
    %v891 = vpack.c.b16 %v837, %v835
    %v892 = vpack.c.b16 %v838, %v836
    %v893 = vpack.c.b16 %v841, %v839
    %v894 = vpack.c.b16 %v842, %v840
    %v895 = vpack.c.b16 %v845, %v843
    %v896 = vpack.c.b16 %v846, %v844
    %v897 = vpack.c.b16 %v849, %v847
    %v898 = vpack.c.b16 %v850, %v848
    %v899 = vpack.c.b16 %v853, %v851
    %v900 = vpack.c.b16 %v854, %v852
    %v901 = vpack.c.b16 %v857, %v855
    %v902 = vpack.c.b16 %v858, %v856
    %v903 = vpack.c.b16 %v861, %v859
    %v904 = vpack.c.b16 %v862, %v860
    %v905 = vpack.c.b16 %v865, %v863
    %v906 = vpack.c.b16 %v866, %v864
    %v907 = vpack.c.b16 %v869, %v867
    %v908 = vpack.c.b16 %v870, %v868
    %v909 = vpack.c.b16 %v873, %v871
    %v910 = vpack.c.b16 %v874, %v872
    %v911 = vpack.c.b16 %v877, %v875
    %v912 = vpack.c.b16 %v878, %v876
    %v913 = vpack.c.b16 %v881, %v879
    %v914 = vpack.c.b16 %v882, %v880
    %947 = vmatprep.subr.bf16.mxu0 %v898
    %948 = vmatpush1.bf16.msra.mxu0 %v897
    %949 = vmatprep.subr.bf16.mxu0 %v896
    %950 = vmatpush1.bf16.msra.mxu0 %v895
    %951 = vmatprep.subr.bf16.mxu0 %v894
    %952 = vmatpush1.bf16.msra.mxu0 %v893
    %953 = vmatprep.subr.bf16.mxu0 %v892
    %954 = vmatpush1.bf16.msra.mxu0 %v891
    %955 = vmatprep.subr.bf16.mxu0 %v890
    %956 = vmatpush1.bf16.msra.mxu0 %v889
    %957 = vmatprep.subr.bf16.mxu0 %v888
    %958 = vmatpush1.bf16.msra.mxu0 %v887
    %959 = vmatprep.subr.bf16.mxu0 %v886
    %960 = vmatpush1.bf16.msra.mxu0 %v885
    %961 = vmatprep.subr.bf16.mxu0 %v884
    %962 = vmatpush1.bf16.msra.mxu0 %v883
    %963 = vmatprep.subr.bf16.mxu0 %v914
    %964 = vmatpush2.bf16.msra.mxu0 %v913
    %965 = vmatprep.subr.bf16.mxu0 %v912
    %966 = vmatpush2.bf16.msra.mxu0 %v911
    %967 = vmatprep.subr.bf16.mxu0 %v910
    %968 = vmatpush2.bf16.msra.mxu0 %v909
    %969 = vmatprep.subr.bf16.mxu0 %v908
    %970 = vmatpush2.bf16.msra.mxu0 %v907
    %971 = vmatprep.subr.bf16.mxu0 %v906
    %972 = vmatpush2.bf16.msra.mxu0 %v905
    %973 = vmatprep.subr.bf16.mxu0 %v904
    %974 = vmatpush2.bf16.msra.mxu0 %v903
    %975 = vmatprep.subr.bf16.mxu0 %v902
    %976 = vmatpush2.bf16.msra.mxu0 %v901
    %977 = vmatprep.subr.bf16.mxu0 %v900
    %978 = vmatpush2.bf16.msra.mxu0 %v899
    %979 = vmatprep.mubr.bf16.mxu0 %v742
    %980 = vmatmul.mubr.bf16.gmra.mxu0 %v741
    %v981 = vpop.f32.mrf.mxu0
    %v982 = vadd.f32 %v780, %v981
    %v983 = vpop.f32.mrf.mxu0
    %v984 = vadd.f32 %v784, %v983
    %v985 = vpop.f32.mrf.mxu0
    %v986 = vadd.f32 %v780, %v985
    %v987 = vpop.f32.mrf.mxu0
    %v988 = vadd.f32 %v784, %v987
    %989 = vdwg.mxu0
    %v990 = vtanh.pop %v982
    %v991 = vtanh.pop %v984
    %v992 = vtanh.pop %v986
    %v993 = vtanh.pop %v988
    %v994 = vpack.c.bf16 %v992, %v990
    %v995 = vpack.c.bf16 %v993, %v991
    %v996 = vld [vmem:[#allocation6] sm:$0xf]
    %v997 = vld [vmem:[#allocation6 + $0x4] sm:$0xf]
    %v998 = vld [vmem:[#allocation6 + $0x8] sm:$0xf]
    %v999 = vld [vmem:[#allocation6 + $0xc] sm:$0xf]
    %v1000 = vld [vmem:[#allocation6 + $0x10] sm:$0xf]
    %v1001 = vld [vmem:[#allocation6 + $0x14] sm:$0xf]
    %v1002 = vld [vmem:[#allocation6 + $0x18] sm:$0xf]
    %v1003 = vld [vmem:[#allocation6 + $0x1c] sm:$0xf]
    %v1004 = vld [vmem:[#allocation6 + $0x20] sm:$0xf]
    %v1005 = vld [vmem:[#allocation6 + $0x24] sm:$0xf]
    %v1006 = vld [vmem:[#allocation6 + $0x28] sm:$0xf]
    %v1007 = vld [vmem:[#allocation6 + $0x2c] sm:$0xf]
    %v1008 = vld [vmem:[#allocation6 + $0x30] sm:$0xf]
    %v1009 = vld [vmem:[#allocation6 + $0x34] sm:$0xf]
    %v1010 = vld [vmem:[#allocation6 + $0x38] sm:$0xf]
    %v1011 = vld [vmem:[#allocation6 + $0x3c] sm:$0xf]
    %v1012 = vld [vmem:[#allocation6 + $0x40] sm:$0xf]
    %v1013 = vld [vmem:[#allocation6 + $0x44] sm:$0xf]
    %v1014 = vld [vmem:[#allocation6 + $0x48] sm:$0xf]
    %v1015 = vld [vmem:[#allocation6 + $0x4c] sm:$0xf]
    %v1016 = vld [vmem:[#allocation6 + $0x50] sm:$0xf]
    %v1017 = vld [vmem:[#allocation6 + $0x54] sm:$0xf]
    %v1018 = vld [vmem:[#allocation6 + $0x58] sm:$0xf]
    %v1019 = vld [vmem:[#allocation6 + $0x5c] sm:$0xf]
    %v1020 = vld [vmem:[#allocation6 + $0x60] sm:$0xf]
    %v1021 = vld [vmem:[#allocation6 + $0x64] sm:$0xf]
    %v1022 = vld [vmem:[#allocation6 + $0x68] sm:$0xf]
    %v1023 = vld [vmem:[#allocation6 + $0x6c] sm:$0xf]
    %v1024 = vld [vmem:[#allocation6 + $0x70] sm:$0xf]
    %v1025 = vld [vmem:[#allocation6 + $0x74] sm:$0xf]
    %v1026 = vld [vmem:[#allocation6 + $0x78] sm:$0xf]
    %v1027 = vld [vmem:[#allocation6 + $0x7c] sm:$0xf]
    %v1028 = vld [vmem:[%s8] sm:$0x1]
    %v1030 = vlaneseq
    %v1031 = vshrl.u32 %v1030, 7
    %v1032 = vsub.s32 0, %v1031
    %v1033 = vrot.slane %v1028, %v1032
    %v1067 = vunpack.c.l.b16 %v996
    %v1068 = vunpack.c.l.b16 %v997
    %v1069 = vunpack.c.l.b16 %v998
    %v1070 = vunpack.c.l.b16 %v999
    %v1071 = vunpack.c.l.b16 %v1000
    %v1072 = vunpack.c.l.b16 %v1001
    %v1073 = vunpack.c.l.b16 %v1002
    %v1074 = vunpack.c.l.b16 %v1003
    %v1075 = vunpack.c.l.b16 %v1004
    %v1076 = vunpack.c.l.b16 %v1005
    %v1077 = vunpack.c.l.b16 %v1006
    %v1078 = vunpack.c.l.b16 %v1007
    %v1079 = vunpack.c.l.b16 %v1008
    %v1080 = vunpack.c.l.b16 %v1009
    %v1081 = vunpack.c.l.b16 %v1010
    %v1082 = vunpack.c.l.b16 %v1011
    %v1083 = vunpack.c.l.b16 %v1012
    %v1084 = vunpack.c.l.b16 %v1013
    %v1085 = vunpack.c.l.b16 %v1014
    %v1086 = vunpack.c.l.b16 %v1015
    %v1087 = vunpack.c.l.b16 %v1016
    %v1088 = vunpack.c.l.b16 %v1017
    %v1089 = vunpack.c.l.b16 %v1018
    %v1090 = vunpack.c.l.b16 %v1019
    %v1091 = vunpack.c.l.b16 %v1020
    %v1092 = vunpack.c.l.b16 %v1021
    %v1093 = vunpack.c.l.b16 %v1022
    %v1094 = vunpack.c.l.b16 %v1023
    %v1095 = vunpack.c.l.b16 %v1024
    %v1096 = vunpack.c.l.b16 %v1025
    %v1097 = vunpack.c.l.b16 %v1026
    %v1098 = vunpack.c.l.b16 %v1027
    %v1099 = vpack.c.b16 %v1068, %v1067
    %v1100 = vpack.c.b16 %v1070, %v1069
    %v1101 = vpack.c.b16 %v1072, %v1071
    %v1102 = vpack.c.b16 %v1074, %v1073
    %v1103 = vpack.c.b16 %v1076, %v1075
    %v1104 = vpack.c.b16 %v1078, %v1077
    %v1105 = vpack.c.b16 %v1080, %v1079
    %v1106 = vpack.c.b16 %v1082, %v1081
    %v1107 = vpack.c.b16 %v1084, %v1083
    %v1108 = vpack.c.b16 %v1086, %v1085
    %v1109 = vpack.c.b16 %v1088, %v1087
    %v1110 = vpack.c.b16 %v1090, %v1089
    %v1111 = vpack.c.b16 %v1092, %v1091
    %v1112 = vpack.c.b16 %v1094, %v1093
    %v1113 = vpack.c.b16 %v1096, %v1095
    %v1114 = vpack.c.b16 %v1098, %v1097
    %1131 = vmatprep.subr.bf16.mxu0 0
    %1132 = vmatpush1.bf16.msra.mxu0 %v1106
    %1133 = vmatprep.subr.bf16.mxu0 0
    %1134 = vmatpush1.bf16.msra.mxu0 %v1105
    %1135 = vmatprep.subr.bf16.mxu0 0
    %1136 = vmatpush1.bf16.msra.mxu0 %v1104
    %1137 = vmatprep.subr.bf16.mxu0 0
    %1138 = vmatpush1.bf16.msra.mxu0 %v1103
    %1139 = vmatprep.subr.bf16.mxu0 0
    %1140 = vmatpush1.bf16.msra.mxu0 %v1102
    %1141 = vmatprep.subr.bf16.mxu0 0
    %1142 = vmatpush1.bf16.msra.mxu0 %v1101
    %1143 = vmatprep.subr.bf16.mxu0 0
    %1144 = vmatpush1.bf16.msra.mxu0 %v1100
    %1145 = vmatprep.subr.bf16.mxu0 0
    %1146 = vmatpush1.bf16.msra.mxu0 %v1099
    %1147 = vmatprep.subr.bf16.mxu0 0
    %1148 = vmatpush2.bf16.msra.mxu0 %v1114
    %1149 = vmatprep.subr.bf16.mxu0 0
    %1150 = vmatpush2.bf16.msra.mxu0 %v1113
    %1151 = vmatprep.subr.bf16.mxu0 0
    %1152 = vmatpush2.bf16.msra.mxu0 %v1112
    %1153 = vmatprep.subr.bf16.mxu0 0
    %1154 = vmatpush2.bf16.msra.mxu0 %v1111
    %1155 = vmatprep.subr.bf16.mxu0 0
    %1156 = vmatpush2.bf16.msra.mxu0 %v1110
    %1157 = vmatprep.subr.bf16.mxu0 0
    %1158 = vmatpush2.bf16.msra.mxu0 %v1109
    %1159 = vmatprep.subr.bf16.mxu0 0
    %1160 = vmatpush2.bf16.msra.mxu0 %v1108
    %1161 = vmatprep.subr.bf16.mxu0 0
    %1162 = vmatpush2.bf16.msra.mxu0 %v1107
    %1163 = vmatprep.mubr.bf16.mxu0 %v995
    %1164 = vmatmul.mubr.bf16.gmra.mxu0 %v994
    %v1165 = vpop.f32.mrf.mxu0
    %v1166 = vadd.f32 %v1033, %v1165
    %v1167 = vpop.f32.mrf.mxu0
    %v1168 = vpop.f32.mrf.mxu0
    %v1169 = vadd.f32 %v1033, %v1168
    %v1170 = vpop.f32.mrf.mxu0
    %1171 = vdwg.mxu0
    %v1172 = vtanh.pop %v1166
    %v1173 = vtanh.pop %v1169
    %v1174 = vpack.c.bf16 %v1173, %v1172
    %v1175 = vld [vmem:[%s9] sm:$0xf]
    %v1176 = vld [vmem:[%s9 + $0x4] sm:$0xf]
    %v1177 = vld [vmem:[%s9 + $0x8] sm:$0xf]
    %v1178 = vld [vmem:[%s9 + $0xc] sm:$0xf]
    %v1179 = vld [vmem:[%s9 + $0x10] sm:$0xf]
    %v1180 = vld [vmem:[%s9 + $0x14] sm:$0xf]
    %v1181 = vld [vmem:[%s9 + $0x18] sm:$0xf]
    %v1182 = vld [vmem:[%s9 + $0x1c] sm:$0xf]
    %v1183 = vld [vmem:[%s9 + $0x20] sm:$0xf]
    %v1184 = vld [vmem:[%s9 + $0x24] sm:$0xf]
    %v1185 = vld [vmem:[%s9 + $0x28] sm:$0xf]
    %v1186 = vld [vmem:[%s9 + $0x2c] sm:$0xf]
    %v1187 = vld [vmem:[%s9 + $0x30] sm:$0xf]
    %v1188 = vld [vmem:[%s9 + $0x34] sm:$0xf]
    %v1189 = vld [vmem:[%s9 + $0x38] sm:$0xf]
    %v1190 = vld [vmem:[%s9 + $0x3c] sm:$0xf]
    %v1191 = vld [vmem:[%s10] sm:$0x1]
    %v1193 = vlaneseq
    %v1194 = vshrl.u32 %v1193, 7
    %v1195 = vsub.s32 0, %v1194
    %v1196 = vrot.slane %v1191, %v1195
    %v1214 = vunpack.c.l.b16 %v1175
    %v1215 = vunpack.c.l.b16 %v1176
    %v1216 = vunpack.c.l.b16 %v1177
    %v1217 = vunpack.c.l.b16 %v1178
    %v1218 = vunpack.c.l.b16 %v1179
    %v1219 = vunpack.c.l.b16 %v1180
    %v1220 = vunpack.c.l.b16 %v1181
    %v1221 = vunpack.c.l.b16 %v1182
    %v1222 = vunpack.c.l.b16 %v1183
    %v1223 = vunpack.c.l.b16 %v1184
    %v1224 = vunpack.c.l.b16 %v1185
    %v1225 = vunpack.c.l.b16 %v1186
    %v1226 = vunpack.c.l.b16 %v1187
    %v1227 = vunpack.c.l.b16 %v1188
    %v1228 = vunpack.c.l.b16 %v1189
    %v1229 = vunpack.c.l.b16 %v1190
    %v1230 = vpack.c.b16 %v1215, %v1214
    %v1231 = vpack.c.b16 %v1217, %v1216
    %v1232 = vpack.c.b16 %v1219, %v1218
    %v1233 = vpack.c.b16 %v1221, %v1220
    %v1234 = vpack.c.b16 %v1223, %v1222
    %v1235 = vpack.c.b16 %v1225, %v1224
    %v1236 = vpack.c.b16 %v1227, %v1226
    %v1237 = vpack.c.b16 %v1229, %v1228
    %1246 = vmatprep.subr.bf16.mxu0 0
    %1247 = vmatpush1.bf16.msra.mxu0 %v1237
    %1248 = vmatprep.subr.bf16.mxu0 0
    %1249 = vmatpush1.bf16.msra.mxu0 %v1236
    %1250 = vmatprep.subr.bf16.mxu0 0
    %1251 = vmatpush1.bf16.msra.mxu0 %v1235
    %1252 = vmatprep.subr.bf16.mxu0 0
    %1253 = vmatpush1.bf16.msra.mxu0 %v1234
    %1254 = vmatprep.subr.bf16.mxu0 0
    %1255 = vmatpush1.bf16.msra.mxu0 %v1233
    %1256 = vmatprep.subr.bf16.mxu0 0
    %1257 = vmatpush1.bf16.msra.mxu0 %v1232
    %1258 = vmatprep.subr.bf16.mxu0 0
    %1259 = vmatpush1.bf16.msra.mxu0 %v1231
    %1260 = vmatprep.subr.bf16.mxu0 0
    %1261 = vmatpush1.bf16.msra.mxu0 %v1230
    %1262 = vmatprep.subr.bf16.mxu0 0
    %1263 = vmatpush2.bf16.msra.mxu0 0
    %1264 = vmatprep.subr.bf16.mxu0 0
    %1265 = vmatpush2.bf16.msra.mxu0 0
    %1266 = vmatprep.subr.bf16.mxu0 0
    %1267 = vmatpush2.bf16.msra.mxu0 0
    %1268 = vmatprep.subr.bf16.mxu0 0
    %1269 = vmatpush2.bf16.msra.mxu0 0
    %1270 = vmatprep.subr.bf16.mxu0 0
    %1271 = vmatpush2.bf16.msra.mxu0 0
    %1272 = vmatprep.subr.bf16.mxu0 0
    %1273 = vmatpush2.bf16.msra.mxu0 0
    %1274 = vmatprep.subr.bf16.mxu0 0
    %1275 = vmatpush2.bf16.msra.mxu0 0
    %1276 = vmatprep.subr.bf16.mxu0 0
    %1277 = vmatpush2.bf16.msra.mxu0 0
    %1278 = vmatprep.mubr.bf16.mxu0 0
    %1279 = vmatmul.mubr.bf16.gmra.mxu0 %v1174
    %v1280 = vpop.f32.mrf.mxu0
    %v1281 = vadd.f32 %v1196, %v1280
    %v1282 = vpop.f32.mrf.mxu0
    %v1283 = vpop.f32.mrf.mxu0
    %v1284 = vadd.f32 %v1196, %v1283
    %v1285 = vpop.f32.mrf.mxu0
    %1286 = vdwg.mxu0
    %vm1287 = vcmask 130048
    %1288 = vst.msk [vmem:[%s11] sm:$0xff] %vm1287, %v1281
    %1289 = vst.msk [vmem:[%s11 + $0x8] sm:$0xff] %vm1287, %v1284
    // Predicated region
    $region58: #{_mlp_forward_impl.1} parent=1 // pred_check
      _
    $region59: #{_mlp_forward_impl.1} parent=1 // pred_check_branch
      %1291 = sbr.rel (0) target = $region61
    $region60: #{_mlp_forward_impl.1} parent=1 // pred_region
      _
    $region61: #{_mlp_forward_impl.1} parent=1 // pred_fallthru
      _
    // Predicated region
    $region62: #{_mlp_forward_impl.1} parent=1 // pred_check
      _
    $region63: #{_mlp_forward_impl.1} parent=1 // pred_check_branch
      %1293 = sbr.rel (0) target = $region65
    $region64: #{_mlp_forward_impl.1} parent=1 // pred_region
      _
    $region65: #{_mlp_forward_impl.1} parent=1 // pred_fallthru
      _
    %1294 = vsyncpa [#allocation3], 1
    %1295 = vsyncpa [#allocation5], 1

</llo_original>
